<compile_context>
chip_gen: v6e
topology: v6e:2x2x1
jax: 0.10.0
libtpu: 0.0.40
codegen_flags: <defaults>
</compile_context>

<pallas_src>
import jax
import jax.numpy as jnp
from jax.experimental import pallas as pl
from jax.experimental.pallas import tpu as pltpu

EPS = 1e-5
NEG_BIG = -1e30          # padded-class bias -> exp underflows to exactly 0 (f32 only)
SLAB_SHAPE = (56, 128)   # 7 (8,128) tiles: 6 lane-0-aligned W^T tiles + 1 bias tile


def mlp_kernel(p_ref, x_ref, o_ref):
    """p_ref: (56,128) packed f32 params (resident across the grid).
    x_ref: (8, TILE) packed input  -- sublanes 0-3: batch-half-A features,
                                      sublanes 4-7: batch-half-B features.
    o_ref: (8, TILE) packed output -- sublanes 0-2: half-A class probs,
                                      sublanes 4-6: half-B class probs."""
    x = x_ref[...].astype(jnp.float32)

    # Lane-0-aligned (8,8) weight views, one (8,128) tile each.
    w1a = p_ref[0:8, 0:8]      # layer-1 W^T reading half-A input sublanes (cols 0-3)
    w1b = p_ref[8:16, 0:8]     # layer-1 W^T reading half-B input sublanes (cols 4-7)
    w2 = p_ref[16:24, 0:8]
    w3 = p_ref[24:32, 0:8]
    w4a = p_ref[32:40, 0:8]    # final W^T writing class rows 0-2 (half A)
    w4b = p_ref[40:48, 0:8]    # final W^T writing class rows 4-6 (half B)
    b1 = p_ref[48:56, 0:1]
    b2 = p_ref[48:56, 1:2]
    b3 = p_ref[48:56, 2:3]
    b4a = p_ref[48:56, 3:4]
    b4b = p_ref[48:56, 4:5]

    def stack(w1, w4, b4):
        # [BN -> Linear -> ReLU] x3 with BN folded into W / b.
        h = jnp.maximum(jnp.dot(w1, x, preferred_element_type=jnp.float32) + b1, 0.0)
        h = jnp.maximum(jnp.dot(w2, h, preferred_element_type=jnp.float32) + b2, 0.0)
        h = jnp.maximum(jnp.dot(w3, h, preferred_element_type=jnp.float32) + b3, 0.0)
        # Dropout(p=0.1) eval mode: identity.
        logits = jnp.dot(w4, h, preferred_element_type=jnp.float32) + b4
        z = logits - jnp.max(logits, axis=0, keepdims=True)
        e = jnp.exp(z)
        s = jnp.sum(e, axis=0, keepdims=True)
        inv = pl.reciprocal(s, approx=True)      # EUP slot (free)
        inv = inv * (2.0 - s * inv)              # one Newton step -> full f32 accuracy
        return e * inv                           # padded class rows are exactly 0

    probs_a = stack(w1a, w4a, b4a)   # nonzero only in rows 0-2
    probs_b = stack(w1b, w4b, b4b)   # nonzero only in rows 4-6
    o_ref[...] = (probs_a + probs_b).astype(o_ref.dtype)


def _round_up(n, m):
    return ((n + m - 1) // m) * m


def _fold_bn_into_linear(gamma, beta, mean, var, w, b):
    """Eval-mode BN followed by Linear == Linear with rescaled W and shifted b."""
    scale = gamma.reshape(-1) * jax.lax.rsqrt(var.reshape(-1) + EPS)
    shift = beta.reshape(-1) - mean.reshape(-1) * scale
    w_f = w * scale[:, None]            # (c_in, c_out)
    b_f = b.reshape(-1) + shift @ w     # (c_out,)
    return w_f, b_f


def _pack_param_slab(params):
    (g1, be1, m1, v1, w1, b1,
     g2, be2, m2, v2, w2, b2,
     g3, be3, m3, v3, w3, b3,
     w4, b4) = params
    w1f, b1f = _fold_bn_into_linear(g1, be1, m1, v1, w1, b1)   # (4,8), (8,)
    w2f, b2f = _fold_bn_into_linear(g2, be2, m2, v2, w2, b2)   # (8,8), (8,)
    w3f, b3f = _fold_bn_into_linear(g3, be3, m3, v3, w3, b3)   # (8,4), (4,)
    w4f, b4f = w4, b4.reshape(-1)                              # (4,3), (3,)

    c0, c1 = w1f.shape
    c2 = w2f.shape[1]
    c3 = w3f.shape[1]
    nc = w4f.shape[1]
    # Packed layout limits (jump_size=4): 4 input feats per half, <=8 hidden, <=4 classes.
    assert c0 <= 4 and c1 <= 8 and c2 <= 8 and c3 <= 4 and nc <= 4

    slab = jnp.zeros(SLAB_SHAPE, jnp.float32)
    slab = slab.at[0:c1, 0:c0].set(w1f.T)              # W1^T, reads half-A sublanes 0-3
    slab = slab.at[8:8 + c1, 4:4 + c0].set(w1f.T)      # W1^T, reads half-B sublanes 4-7
    slab = slab.at[16:16 + c2, 0:c1].set(w2f.T)
    slab = slab.at[24:24 + c3, 0:c2].set(w3f.T)
    slab = slab.at[32:32 + nc, 0:c3].set(w4f.T)        # class rows 0-2 (half A)
    slab = slab.at[44:44 + nc, 0:c3].set(w4f.T)        # class rows 4-6 (half B)
    slab = slab.at[48:48 + c1, 0].set(b1f)
    slab = slab.at[48:48 + c2, 1].set(b2f)
    slab = slab.at[48:48 + c3, 2].set(b3f)
    slab = slab.at[48:56, 3].set(
        jnp.full((8,), NEG_BIG, jnp.float32).at[0:nc].set(b4f))
    slab = slab.at[48:56, 4].set(
        jnp.full((8,), NEG_BIG, jnp.float32).at[4:4 + nc].set(b4f))
    return slab


def mlp_forward_packed(xt, slab, *, tile_cap=32768, min_grid=2):
    """Packed interface: xt is (8, C) feature-major (C a multiple of 128, two
    batch halves per lane column); returns (8, C) packed class probabilities.
    Use this directly inside a larger model to avoid wrapper layout passes."""
    _, cols = xt.shape
    # Large tiles amortize per-step overhead; keep >= min_grid steps for v7x's
    # two TensorCores when the batch is big enough.
    tile_n = max(128, min(tile_cap, _round_up(pl.cdiv(cols, min_grid), 128)))
    grid = (pl.cdiv(cols, tile_n),)

    cost = pl.CostEstimate(
        flops=2 * 2 * 4 * 8 * 8 * cols,                 # 2 halves x 4 (8x8) matvecs / column
        transcendentals=2 * 8 * cols,                   # exp
        bytes_accessed=(2 * 8 * cols + SLAB_SHAPE[0] * SLAB_SHAPE[1]) * 4,
    )
    return pl.pallas_call(
        mlp_kernel,
        out_shape=jax.ShapeDtypeStruct((8, cols), xt.dtype),
        grid=grid,
        in_specs=[
            pl.BlockSpec(SLAB_SHAPE, lambda i: (0, 0)),     # params: one DMA, resident
            pl.BlockSpec((8, tile_n), lambda i: (0, i)),    # packed input tile
        ],
        out_specs=pl.BlockSpec((8, tile_n), lambda i: (0, i)),
        compiler_params=pltpu.CompilerParams(
            dimension_semantics=("parallel",),
            vmem_limit_bytes=48 * 1024 * 1024,              # headroom on v7x (64 MiB phys)
        ),
        cost_estimate=cost,
    )(slab, xt)


def mlp_forward(x, params, *, tile_cap=32768):
    """Standard (N, jump_size) -> (N, 3) interface matching the PyTorch module.
    NOTE: the pack/unpack below exists only to present the PyTorch-shaped API;
    in a full pipeline, keep the packed (8, C) layout across ops and call
    mlp_forward_packed() directly (avoids the extra HBM round trips)."""
    n, c_in = x.shape
    slab = _pack_param_slab(params)

    half = (n + 1) // 2                       # two batch rows per lane column
    cols = _round_up(half, 128)               # pad lanes to 128 only
    xt = jnp.zeros((8, cols), x.dtype)
    xt = xt.at[0:c_in, 0:half].set(x[:half].T)            # half A -> sublanes 0-3
    xt = xt.at[4:4 + c_in, 0:n - half].set(x[half:].T)    # half B -> sublanes 4-7

    out_t = mlp_forward_packed(xt, slab, tile_cap=tile_cap)
    out = jnp.concatenate(
        [out_t[0:3, 0:half].T, out_t[4:7, 0:n - half].T], axis=0)
    return out.astype(jnp.float32)


def _bn(x, gamma, beta, mean, var):
    inv = jax.lax.rsqrt(var + EPS)
    return (x - mean) * inv * gamma + beta


def init_params(key, jump_size=4):
    sizes = [jump_size * s for s in (1, 2, 2, 1)]  # [4, 8, 8, 4]
    params = []
    keys = jax.random.split(key, 16)
    ki = 0
    for i in range(3):
        c_in, c_out = sizes[i], sizes[i + 1]
        gamma = jax.random.uniform(keys[ki], (1, c_in), jnp.float32, 0.5, 1.5); ki += 1
        beta = jax.random.normal(keys[ki], (1, c_in), jnp.float32) * 0.1; ki += 1
        mean = jax.random.normal(keys[ki], (1, c_in), jnp.float32) * 0.1; ki += 1
        var = jax.random.uniform(keys[ki], (1, c_in), jnp.float32, 0.5, 1.5); ki += 1
        bound = 1.0 / jnp.sqrt(c_in)
        w = jax.random.uniform(keys[ki], (c_in, c_out), jnp.float32, -bound, bound); ki += 1
        b = jax.random.uniform(jax.random.fold_in(keys[ki - 1], 1), (1, c_out),
                               jnp.float32, -bound, bound)
        params += [gamma, beta, mean, var, w, b]
    c_in = sizes[-1]
    bound = 1.0 / jnp.sqrt(c_in)
    w4 = jax.random.uniform(keys[ki], (c_in, 3), jnp.float32, -bound, bound); ki += 1
    b4 = jax.random.uniform(keys[ki], (1, 3), jnp.float32, -bound, bound); ki += 1
    return params + [w4, b4]


def reference_forward(x, params):
    (g1, be1, m1, v1, w1, b1,
     g2, be2, m2, v2, w2, b2,
     g3, be3, m3, v3, w3, b3,
     w4, b4) = params
    h = _bn(x, g1, be1, m1, v1) @ w1 + b1
    h = jnp.maximum(h, 0.0)
    h = _bn(h, g2, be2, m2, v2) @ w2 + b2
    h = jnp.maximum(h, 0.0)
    h = _bn(h, g3, be3, m3, v3) @ w3 + b3
    h = jnp.maximum(h, 0.0)
    logits = h @ w4 + b4
    return jax.nn.softmax(logits, axis=-1)


if __name__ == "__main__":
    key = jax.random.PRNGKey(0)
    kx, kp = jax.random.split(key)
    batch, jump_size = 8, 4
    x = jax.random.normal(kx, (batch, jump_size), jnp.float32)
    params = init_params(kp, jump_size)

    fwd = jax.jit(mlp_forward)
    out = jax.block_until_ready(fwd(x, params))
    ref = reference_forward(x, params)
    assert out.shape == (batch, 3)
    assert jnp.allclose(out, ref, atol=1e-5, rtol=1e-5)
    assert jnp.allclose(jnp.sum(out, axis=-1), jnp.ones((batch,)), atol=1e-5)

    # Larger batch: exercises the multi-step "parallel" grid and a boundary tile.
    batch2 = 700
    x2 = jax.random.normal(jax.random.fold_in(kx, 1), (batch2, jump_size), jnp.float32)
    out2 = jax.block_until_ready(fwd(x2, params))
    ref2 = reference_forward(x2, params)
    assert out2.shape == (batch2, 3)
    assert jnp.allclose(out2, ref2, atol=1e-5, rtol=1e-5)
    assert jnp.allclose(jnp.sum(out2, axis=-1), jnp.ones((batch2,)), atol=1e-5)

    print("KERNEL_OK")
</pallas_src>

<mosaic_0001>
module attributes {stable_mosaic.version = 11 : i64} {
  func.func @mlp_kernel(%arg0: i32, %arg1: memref<56x128xf32, #tpu.memory_space<vmem>>, %arg2: memref<8x128xf32, #tpu.memory_space<vmem>>, %arg3: memref<8x128xf32, #tpu.memory_space<vmem>>) attributes {dimension_semantics = [#tpu.dimension_semantics<parallel>], iteration_bounds = array<i64: 1>, scalar_prefetch = 0 : i64, scratch_operands = 0 : i64, tpu.core_type = #tpu.core_type<tc>, window_params = [{pipeline_mode = #tpu.pipeline_mode<synchronous>, transform_indices = @transform_0, window_bounds = array<i64: 56, 128>}, {transform_indices = @transform_1, window_bounds = array<i64: 8, 128>}, {transform_indices = @transform_2, window_bounds = array<i64: 8, 128>}]} {
    %c0 = arith.constant 0 : index
    %c0_0 = arith.constant 0 : index
    %0 = vector.load %arg2[%c0, %c0_0] : memref<8x128xf32, #tpu.memory_space<vmem>>, vector<8x128xf32>
    %c0_1 = arith.constant 0 : index
    %c0_2 = arith.constant 0 : index
    %1 = vector.load %arg1[%c0_1, %c0_2] : memref<56x128xf32, #tpu.memory_space<vmem>>, vector<8x8xf32>
    %c8 = arith.constant 8 : index
    %c0_3 = arith.constant 0 : index
    %2 = vector.load %arg1[%c8, %c0_3] : memref<56x128xf32, #tpu.memory_space<vmem>>, vector<8x8xf32>
    %c16 = arith.constant 16 : index
    %c0_4 = arith.constant 0 : index
    %3 = vector.load %arg1[%c16, %c0_4] : memref<56x128xf32, #tpu.memory_space<vmem>>, vector<8x8xf32>
    %c24 = arith.constant 24 : index
    %c0_5 = arith.constant 0 : index
    %4 = vector.load %arg1[%c24, %c0_5] : memref<56x128xf32, #tpu.memory_space<vmem>>, vector<8x8xf32>
    %c32 = arith.constant 32 : index
    %c0_6 = arith.constant 0 : index
    %5 = vector.load %arg1[%c32, %c0_6] : memref<56x128xf32, #tpu.memory_space<vmem>>, vector<8x8xf32>
    %c40 = arith.constant 40 : index
    %c0_7 = arith.constant 0 : index
    %6 = vector.load %arg1[%c40, %c0_7] : memref<56x128xf32, #tpu.memory_space<vmem>>, vector<8x8xf32>
    %c48 = arith.constant 48 : index
    %c0_8 = arith.constant 0 : index
    %7 = vector.load %arg1[%c48, %c0_8] : memref<56x128xf32, #tpu.memory_space<vmem>>, vector<8x1xf32>
    %c48_9 = arith.constant 48 : index
    %c1 = arith.constant 1 : index
    %8 = vector.load %arg1[%c48_9, %c1] : memref<56x128xf32, #tpu.memory_space<vmem>>, vector<8x1xf32>
    %c48_10 = arith.constant 48 : index
    %c2 = arith.constant 2 : index
    %9 = vector.load %arg1[%c48_10, %c2] : memref<56x128xf32, #tpu.memory_space<vmem>>, vector<8x1xf32>
    %c48_11 = arith.constant 48 : index
    %c3 = arith.constant 3 : index
    %10 = vector.load %arg1[%c48_11, %c3] : memref<56x128xf32, #tpu.memory_space<vmem>>, vector<8x1xf32>
    %c48_12 = arith.constant 48 : index
    %c4 = arith.constant 4 : index
    %11 = vector.load %arg1[%c48_12, %c4] : memref<56x128xf32, #tpu.memory_space<vmem>>, vector<8x1xf32>
    %cst = arith.constant dense<0.000000e+00> : vector<8x128xf32>
    %12 = tpu.matmul %1, %0, %cst {dimension_numbers = #tpu.dot_dimension_numbers<[1], [0], [0], [1], [0, 0, 1, 1], [], []>} : vector<8x8xf32>, vector<8x128xf32>, vector<8x128xf32> -> vector<8x128xf32>
    %13 = vector.broadcast %7 : vector<8x1xf32> to vector<8x128xf32>
    %14 = arith.addf %12, %13 : vector<8x128xf32>
    %cst_13 = arith.constant 0.000000e+00 : f32
    %15 = vector.broadcast %cst_13 : f32 to vector<8x128xf32>
    %16 = arith.maximumf %14, %15 : vector<8x128xf32>
    %cst_14 = arith.constant dense<0.000000e+00> : vector<8x128xf32>
    %17 = tpu.matmul %3, %16, %cst_14 {dimension_numbers = #tpu.dot_dimension_numbers<[1], [0], [0], [1], [0, 0, 1, 1], [], []>} : vector<8x8xf32>, vector<8x128xf32>, vector<8x128xf32> -> vector<8x128xf32>
    %18 = vector.broadcast %8 : vector<8x1xf32> to vector<8x128xf32>
    %19 = arith.addf %17, %18 : vector<8x128xf32>
    %cst_15 = arith.constant 0.000000e+00 : f32
    %20 = vector.broadcast %cst_15 : f32 to vector<8x128xf32>
    %21 = arith.maximumf %19, %20 : vector<8x128xf32>
    %cst_16 = arith.constant dense<0.000000e+00> : vector<8x128xf32>
    %22 = tpu.matmul %4, %21, %cst_16 {dimension_numbers = #tpu.dot_dimension_numbers<[1], [0], [0], [1], [0, 0, 1, 1], [], []>} : vector<8x8xf32>, vector<8x128xf32>, vector<8x128xf32> -> vector<8x128xf32>
    %23 = vector.broadcast %9 : vector<8x1xf32> to vector<8x128xf32>
    %24 = arith.addf %22, %23 : vector<8x128xf32>
    %cst_17 = arith.constant 0.000000e+00 : f32
    %25 = vector.broadcast %cst_17 : f32 to vector<8x128xf32>
    %26 = arith.maximumf %24, %25 : vector<8x128xf32>
    %cst_18 = arith.constant dense<0.000000e+00> : vector<8x128xf32>
    %27 = tpu.matmul %5, %26, %cst_18 {dimension_numbers = #tpu.dot_dimension_numbers<[1], [0], [0], [1], [0, 0, 1, 1], [], []>} : vector<8x8xf32>, vector<8x128xf32>, vector<8x128xf32> -> vector<8x128xf32>
    %28 = vector.broadcast %10 : vector<8x1xf32> to vector<8x128xf32>
    %29 = arith.addf %27, %28 : vector<8x128xf32>
    %cst_19 = arith.constant dense<0xFF800000> : vector<128xf32>
    %30 = vector.multi_reduction <maximumf>, %29, %cst_19 [0] : vector<8x128xf32> to vector<128xf32>
    %31 = vector.shape_cast %30 : vector<128xf32> to vector<1x128xf32>
    %32 = vector.broadcast %31 : vector<1x128xf32> to vector<8x128xf32>
    %33 = arith.subf %29, %32 : vector<8x128xf32>
    %34 = math.exp %33 : vector<8x128xf32>
    %cst_20 = arith.constant dense<0.000000e+00> : vector<128xf32>
    %35 = vector.multi_reduction <add>, %34, %cst_20 [0] : vector<8x128xf32> to vector<128xf32>
    %36 = vector.shape_cast %35 : vector<128xf32> to vector<1x128xf32>
    %37 = tpu.reciprocal %36 {approx = true} : vector<1x128xf32> -> vector<1x128xf32>
    %38 = arith.mulf %36, %37 : vector<1x128xf32>
    %cst_21 = arith.constant 2.000000e+00 : f32
    %39 = vector.broadcast %cst_21 : f32 to vector<1x128xf32>
    %40 = arith.subf %39, %38 : vector<1x128xf32>
    %41 = arith.mulf %37, %40 : vector<1x128xf32>
    %42 = vector.broadcast %41 : vector<1x128xf32> to vector<8x128xf32>
    %43 = arith.mulf %34, %42 : vector<8x128xf32>
    %cst_22 = arith.constant dense<0.000000e+00> : vector<8x128xf32>
    %44 = tpu.matmul %2, %0, %cst_22 {dimension_numbers = #tpu.dot_dimension_numbers<[1], [0], [0], [1], [0, 0, 1, 1], [], []>} : vector<8x8xf32>, vector<8x128xf32>, vector<8x128xf32> -> vector<8x128xf32>
    %45 = vector.broadcast %7 : vector<8x1xf32> to vector<8x128xf32>
    %46 = arith.addf %44, %45 : vector<8x128xf32>
    %cst_23 = arith.constant 0.000000e+00 : f32
    %47 = vector.broadcast %cst_23 : f32 to vector<8x128xf32>
    %48 = arith.maximumf %46, %47 : vector<8x128xf32>
    %cst_24 = arith.constant dense<0.000000e+00> : vector<8x128xf32>
    %49 = tpu.matmul %3, %48, %cst_24 {dimension_numbers = #tpu.dot_dimension_numbers<[1], [0], [0], [1], [0, 0, 1, 1], [], []>} : vector<8x8xf32>, vector<8x128xf32>, vector<8x128xf32> -> vector<8x128xf32>
    %50 = vector.broadcast %8 : vector<8x1xf32> to vector<8x128xf32>
    %51 = arith.addf %49, %50 : vector<8x128xf32>
    %cst_25 = arith.constant 0.000000e+00 : f32
    %52 = vector.broadcast %cst_25 : f32 to vector<8x128xf32>
    %53 = arith.maximumf %51, %52 : vector<8x128xf32>
    %cst_26 = arith.constant dense<0.000000e+00> : vector<8x128xf32>
    %54 = tpu.matmul %4, %53, %cst_26 {dimension_numbers = #tpu.dot_dimension_numbers<[1], [0], [0], [1], [0, 0, 1, 1], [], []>} : vector<8x8xf32>, vector<8x128xf32>, vector<8x128xf32> -> vector<8x128xf32>
    %55 = vector.broadcast %9 : vector<8x1xf32> to vector<8x128xf32>
    %56 = arith.addf %54, %55 : vector<8x128xf32>
    %cst_27 = arith.constant 0.000000e+00 : f32
    %57 = vector.broadcast %cst_27 : f32 to vector<8x128xf32>
    %58 = arith.maximumf %56, %57 : vector<8x128xf32>
    %cst_28 = arith.constant dense<0.000000e+00> : vector<8x128xf32>
    %59 = tpu.matmul %6, %58, %cst_28 {dimension_numbers = #tpu.dot_dimension_numbers<[1], [0], [0], [1], [0, 0, 1, 1], [], []>} : vector<8x8xf32>, vector<8x128xf32>, vector<8x128xf32> -> vector<8x128xf32>
    %60 = vector.broadcast %11 : vector<8x1xf32> to vector<8x128xf32>
    %61 = arith.addf %59, %60 : vector<8x128xf32>
    %cst_29 = arith.constant dense<0xFF800000> : vector<128xf32>
    %62 = vector.multi_reduction <maximumf>, %61, %cst_29 [0] : vector<8x128xf32> to vector<128xf32>
    %63 = vector.shape_cast %62 : vector<128xf32> to vector<1x128xf32>
    %64 = vector.broadcast %63 : vector<1x128xf32> to vector<8x128xf32>
    %65 = arith.subf %61, %64 : vector<8x128xf32>
    %66 = math.exp %65 : vector<8x128xf32>
    %cst_30 = arith.constant dense<0.000000e+00> : vector<128xf32>
    %67 = vector.multi_reduction <add>, %66, %cst_30 [0] : vector<8x128xf32> to vector<128xf32>
    %68 = vector.shape_cast %67 : vector<128xf32> to vector<1x128xf32>
    %69 = tpu.reciprocal %68 {approx = true} : vector<1x128xf32> -> vector<1x128xf32>
    %70 = arith.mulf %68, %69 : vector<1x128xf32>
    %cst_31 = arith.constant 2.000000e+00 : f32
    %71 = vector.broadcast %cst_31 : f32 to vector<1x128xf32>
    %72 = arith.subf %71, %70 : vector<1x128xf32>
    %73 = arith.mulf %69, %72 : vector<1x128xf32>
    %74 = vector.broadcast %73 : vector<1x128xf32> to vector<8x128xf32>
    %75 = arith.mulf %66, %74 : vector<8x128xf32>
    %76 = arith.addf %43, %75 : vector<8x128xf32>
    %c0_32 = arith.constant 0 : index
    %c0_33 = arith.constant 0 : index
    %77 = vector.load %arg3[%c0_32, %c0_33] : memref<8x128xf32, #tpu.memory_space<vmem>>, vector<8x128xf32>
    tpu.vector_store %arg3[%c0_32, %c0_33], %76 {strides = array<i32>} : memref<8x128xf32, #tpu.memory_space<vmem>>, vector<8x128xf32>,
    return
  }
  func.func @transform_0(%arg0: i32) -> (i32, i32) {
    %c0_i32 = arith.constant 0 : i32
    %c0_i32_0 = arith.constant 0 : i32
    %c0_i32_1 = arith.constant 0 : i32
    return %c0_i32, %c0_i32_0 : i32, i32
  }
  func.func @transform_1(%arg0: i32) -> (i32, i32) {
    %c0_i32 = arith.constant 0 : i32
    %c0_i32_0 = arith.constant 0 : i32
    return %c0_i32, %arg0 : i32, i32
  }
  func.func @transform_2(%arg0: i32) -> (i32, i32) {
    %c0_i32 = arith.constant 0 : i32
    %c0_i32_0 = arith.constant 0 : i32
    return %c0_i32, %arg0 : i32, i32
  }
}

</mosaic_0001>

<llo_original>
// kernel: mlp_forward.1
$region0: #{mlp_forward.1}
  #allocation0 [shape = 'u32[]', space=smem, size = 0x4, offset = 0x4, fixed_abs, tag = 'smem constant byte address 0x4 - core index']
  #allocation1 [shape = 'u32[144,128]{1,0:T(1,128)}', space=vmem, size = 0x12000, scoped, tag = 'internal scratch']
  %s0 = inlined_call_operand.vmem [shape: f32[56,128], index: 0, kind: input, shape index: {}]
  %s1 = inlined_call_operand.vmem [shape: f32[8,128], index: 1, kind: input, shape index: {}]
  %s2 = inlined_call_operand.vmem [shape: f32[8,128], index: 2, kind: output, shape index: {}]
  %s3 = sld [smem:[#allocation0]]
  $region18: #{mlp_forward.1} parent=0
    _
  %s5 = ssub.s32 1, %s3
  %s6 = scalar_select 0, %s5, %s3
  // Predicated region
  $region2: #{mlp_forward.1} parent=0 // pred_check
    _
  $region3: #{mlp_forward.1} parent=0 // pred_check_branch
    %8 = sbr.rel (0) target = $region5
  $region4: #{mlp_forward.1} parent=0 // pred_region
    _
  $region5: #{mlp_forward.1} parent=0 // pred_fallthru
    _
  // Predicated region
  $region6: #{mlp_forward.1} parent=0 // pred_check
    _
  $region7: #{mlp_forward.1} parent=0 // pred_check_branch
    %10 = sbr.rel (0) target = $region9
  $region8: #{mlp_forward.1} parent=0 // pred_region
    _
  $region9: #{mlp_forward.1} parent=0 // pred_fallthru
    _
  %v11 = vld [vmem:[%s1] sm:$0xff]
  %v12 = vld [vmem:[%s0] sm:$0xff]
  %v13 = vld [vmem:[%s0 + $0x8] sm:$0xff]
  %v14 = vld [vmem:[%s0 + $0x10] sm:$0xff]
  %v15 = vld [vmem:[%s0 + $0x18] sm:$0xff]
  %v16 = vld [vmem:[%s0 + $0x20] sm:$0xff]
  %v17 = vld [vmem:[%s0 + $0x28] sm:$0xff]
  %v18 = vld [vmem:[%s0 + $0x30] sm:$0xff]
  %20 = vset.pattern.permute.xlu0 0
  %21 = vperm.xlu0 %20, %v18
  %v22 = vpop.permute.xlu0 %21
  %vm24 = vcmask 64512
  %v26 = vsel %vm24, %v12, 0
  %28 = vmatprep.subr.mxu0 0.0
  %29 = vmatpush1.msra.mxu0 0.0
  %30 = vmatprep.subr.mxu0 0.0
  %31 = vmatpush1.msra.mxu0 0.0
  %32 = vmatprep.subr.mxu0 0.0
  %33 = vmatpush1.msra.mxu0 0.0
  %34 = vmatprep.subr.mxu0 0.0
  %35 = vmatpush1.msra.mxu0 0.0
  %36 = vmatprep.subr.mxu0 0.0
  %37 = vmatpush1.msra.mxu0 0.0
  %38 = vmatprep.subr.mxu0 0.0
  %39 = vmatpush1.msra.mxu0 0.0
  %40 = vmatprep.subr.mxu0 0.0
  %41 = vmatpush1.msra.mxu0 0.0
  %42 = vmatprep.subr.mxu0 0.0
  %43 = vmatpush1.msra.mxu0 0.0
  %44 = vmatprep.subr.mxu0 0.0
  %45 = vmatpush1.msra.mxu0 0.0
  %46 = vmatprep.subr.mxu0 0.0
  %47 = vmatpush1.msra.mxu0 0.0
  %48 = vmatprep.subr.mxu0 0.0
  %49 = vmatpush1.msra.mxu0 0.0
  %50 = vmatprep.subr.mxu0 0.0
  %51 = vmatpush1.msra.mxu0 0.0
  %52 = vmatprep.subr.mxu0 0.0
  %53 = vmatpush1.msra.mxu0 0.0
  %54 = vmatprep.subr.mxu0 0.0
  %55 = vmatpush1.msra.mxu0 0.0
  %56 = vmatprep.subr.mxu0 0.0
  %57 = vmatpush1.msra.mxu0 0.0
  %58 = vmatprep.subr.mxu0 0.0
  %59 = vmatpush1.msra.mxu0 %v11
  %60 = vmatprep.subr.mxu0 0.0
  %61 = vmatpush2.msra.mxu0 0.0
  %62 = vmatprep.subr.mxu0 0.0
  %63 = vmatpush2.msra.mxu0 0.0
  %64 = vmatprep.subr.mxu0 0.0
  %65 = vmatpush2.msra.mxu0 0.0
  %66 = vmatprep.subr.mxu0 0.0
  %67 = vmatpush2.msra.mxu0 0.0
  %68 = vmatprep.subr.mxu0 0.0
  %69 = vmatpush2.msra.mxu0 0.0
  %70 = vmatprep.subr.mxu0 0.0
  %71 = vmatpush2.msra.mxu0 0.0
  %72 = vmatprep.subr.mxu0 0.0
  %73 = vmatpush2.msra.mxu0 0.0
  %74 = vmatprep.subr.mxu0 0.0
  %75 = vmatpush2.msra.mxu0 0.0
  %76 = vmatprep.subr.mxu0 0.0
  %77 = vmatpush2.msra.mxu0 0.0
  %78 = vmatprep.subr.mxu0 0.0
  %79 = vmatpush2.msra.mxu0 0.0
  %80 = vmatprep.subr.mxu0 0.0
  %81 = vmatpush2.msra.mxu0 0.0
  %82 = vmatprep.subr.mxu0 0.0
  %83 = vmatpush2.msra.mxu0 0.0
  %84 = vmatprep.subr.mxu0 0.0
  %85 = vmatpush2.msra.mxu0 0.0
  %86 = vmatprep.subr.mxu0 0.0
  %87 = vmatpush2.msra.mxu0 0.0
  %88 = vmatprep.subr.mxu0 0.0
  %89 = vmatpush2.msra.mxu0 0.0
  %90 = vmatprep.subr.mxu0 0.0
  %91 = vmatpush2.msra.mxu0 0.0
  %92 = vmatprep.mubr.f32.mxu0 0.0
  %93 = vmatmul.mubr.f32.gmra.mxu0 %v26
  %v94 = vpop.f32.mrf.mxu0
  %v95 = vadd.f32 %v22, %v94
  %v96 = vpop.f32.mrf.mxu0
  %97 = vdwg.mxu0
  %v98 = vmax.f32 %v95, 0.0
  %99 = vset.pattern.permute.xlu0 1
  %100 = vperm.xlu0 %99, %v18
  %v101 = vpop.permute.xlu0 %100
  %v104 = vsel %vm24, %v14, 0
  %106 = vmatprep.subr.mxu0 0.0
  %107 = vmatpush1.msra.mxu0 0.0
  %108 = vmatprep.subr.mxu0 0.0
  %109 = vmatpush1.msra.mxu0 0.0
  %110 = vmatprep.subr.mxu0 0.0
  %111 = vmatpush1.msra.mxu0 0.0
  %112 = vmatprep.subr.mxu0 0.0
  %113 = vmatpush1.msra.mxu0 0.0
  %114 = vmatprep.subr.mxu0 0.0
  %115 = vmatpush1.msra.mxu0 0.0
  %116 = vmatprep.subr.mxu0 0.0
  %117 = vmatpush1.msra.mxu0 0.0
  %118 = vmatprep.subr.mxu0 0.0
  %119 = vmatpush1.msra.mxu0 0.0
  %120 = vmatprep.subr.mxu0 0.0
  %121 = vmatpush1.msra.mxu0 0.0
  %122 = vmatprep.subr.mxu0 0.0
  %123 = vmatpush1.msra.mxu0 0.0
  %124 = vmatprep.subr.mxu0 0.0
  %125 = vmatpush1.msra.mxu0 0.0
  %126 = vmatprep.subr.mxu0 0.0
  %127 = vmatpush1.msra.mxu0 0.0
  %128 = vmatprep.subr.mxu0 0.0
  %129 = vmatpush1.msra.mxu0 0.0
  %130 = vmatprep.subr.mxu0 0.0
  %131 = vmatpush1.msra.mxu0 0.0
  %132 = vmatprep.subr.mxu0 0.0
  %133 = vmatpush1.msra.mxu0 0.0
  %134 = vmatprep.subr.mxu0 0.0
  %135 = vmatpush1.msra.mxu0 0.0
  %136 = vmatprep.subr.mxu0 0.0
  %137 = vmatpush1.msra.mxu0 %v98
  %138 = vmatprep.subr.mxu0 0.0
  %139 = vmatpush2.msra.mxu0 0.0
  %140 = vmatprep.subr.mxu0 0.0
  %141 = vmatpush2.msra.mxu0 0.0
  %142 = vmatprep.subr.mxu0 0.0
  %143 = vmatpush2.msra.mxu0 0.0
  %144 = vmatprep.subr.mxu0 0.0
  %145 = vmatpush2.msra.mxu0 0.0
  %146 = vmatprep.subr.mxu0 0.0
  %147 = vmatpush2.msra.mxu0 0.0
  %148 = vmatprep.subr.mxu0 0.0
  %149 = vmatpush2.msra.mxu0 0.0
  %150 = vmatprep.subr.mxu0 0.0
  %151 = vmatpush2.msra.mxu0 0.0
  %152 = vmatprep.subr.mxu0 0.0
  %153 = vmatpush2.msra.mxu0 0.0
  %154 = vmatprep.subr.mxu0 0.0
  %155 = vmatpush2.msra.mxu0 0.0
  %156 = vmatprep.subr.mxu0 0.0
  %157 = vmatpush2.msra.mxu0 0.0
  %158 = vmatprep.subr.mxu0 0.0
  %159 = vmatpush2.msra.mxu0 0.0
  %160 = vmatprep.subr.mxu0 0.0
  %161 = vmatpush2.msra.mxu0 0.0
  %162 = vmatprep.subr.mxu0 0.0
  %163 = vmatpush2.msra.mxu0 0.0
  %164 = vmatprep.subr.mxu0 0.0
  %165 = vmatpush2.msra.mxu0 0.0
  %166 = vmatprep.subr.mxu0 0.0
  %167 = vmatpush2.msra.mxu0 0.0
  %168 = vmatprep.subr.mxu0 0.0
  %169 = vmatpush2.msra.mxu0 0.0
  %170 = vmatprep.mubr.f32.mxu0 0.0
  %171 = vmatmul.mubr.f32.gmra.mxu0 %v104
  %v172 = vpop.f32.mrf.mxu0
  %v173 = vadd.f32 %v101, %v172
  %v174 = vpop.f32.mrf.mxu0
  %175 = vdwg.mxu0
  %v176 = vmax.f32 %v173, 0.0
  %177 = vset.pattern.permute.xlu0 2
  %178 = vperm.xlu0 %177, %v18
  %v179 = vpop.permute.xlu0 %178
  %v182 = vsel %vm24, %v15, 0
  %184 = vmatprep.subr.mxu0 0.0
  %185 = vmatpush1.msra.mxu0 0.0
  %186 = vmatprep.subr.mxu0 0.0
  %187 = vmatpush1.msra.mxu0 0.0
  %188 = vmatprep.subr.mxu0 0.0
  %189 = vmatpush1.msra.mxu0 0.0
  %190 = vmatprep.subr.mxu0 0.0
  %191 = vmatpush1.msra.mxu0 0.0
  %192 = vmatprep.subr.mxu0 0.0
  %193 = vmatpush1.msra.mxu0 0.0
  %194 = vmatprep.subr.mxu0 0.0
  %195 = vmatpush1.msra.mxu0 0.0
  %196 = vmatprep.subr.mxu0 0.0
  %197 = vmatpush1.msra.mxu0 0.0
  %198 = vmatprep.subr.mxu0 0.0
  %199 = vmatpush1.msra.mxu0 0.0
  %200 = vmatprep.subr.mxu0 0.0
  %201 = vmatpush1.msra.mxu0 0.0
  %202 = vmatprep.subr.mxu0 0.0
  %203 = vmatpush1.msra.mxu0 0.0
  %204 = vmatprep.subr.mxu0 0.0
  %205 = vmatpush1.msra.mxu0 0.0
  %206 = vmatprep.subr.mxu0 0.0
  %207 = vmatpush1.msra.mxu0 0.0
  %208 = vmatprep.subr.mxu0 0.0
  %209 = vmatpush1.msra.mxu0 0.0
  %210 = vmatprep.subr.mxu0 0.0
  %211 = vmatpush1.msra.mxu0 0.0
  %212 = vmatprep.subr.mxu0 0.0
  %213 = vmatpush1.msra.mxu0 0.0
  %214 = vmatprep.subr.mxu0 0.0
  %215 = vmatpush1.msra.mxu0 %v176
  %216 = vmatprep.subr.mxu0 0.0
  %217 = vmatpush2.msra.mxu0 0.0
  %218 = vmatprep.subr.mxu0 0.0
  %219 = vmatpush2.msra.mxu0 0.0
  %220 = vmatprep.subr.mxu0 0.0
  %221 = vmatpush2.msra.mxu0 0.0
  %222 = vmatprep.subr.mxu0 0.0
  %223 = vmatpush2.msra.mxu0 0.0
  %224 = vmatprep.subr.mxu0 0.0
  %225 = vmatpush2.msra.mxu0 0.0
  %226 = vmatprep.subr.mxu0 0.0
  %227 = vmatpush2.msra.mxu0 0.0
  %228 = vmatprep.subr.mxu0 0.0
  %229 = vmatpush2.msra.mxu0 0.0
  %230 = vmatprep.subr.mxu0 0.0
  %231 = vmatpush2.msra.mxu0 0.0
  %232 = vmatprep.subr.mxu0 0.0
  %233 = vmatpush2.msra.mxu0 0.0
  %234 = vmatprep.subr.mxu0 0.0
  %235 = vmatpush2.msra.mxu0 0.0
  %236 = vmatprep.subr.mxu0 0.0
  %237 = vmatpush2.msra.mxu0 0.0
  %238 = vmatprep.subr.mxu0 0.0
  %239 = vmatpush2.msra.mxu0 0.0
  %240 = vmatprep.subr.mxu0 0.0
  %241 = vmatpush2.msra.mxu0 0.0
  %242 = vmatprep.subr.mxu0 0.0
  %243 = vmatpush2.msra.mxu0 0.0
  %244 = vmatprep.subr.mxu0 0.0
  %245 = vmatpush2.msra.mxu0 0.0
  %246 = vmatprep.subr.mxu0 0.0
  %247 = vmatpush2.msra.mxu0 0.0
  %248 = vmatprep.mubr.f32.mxu0 0.0
  %249 = vmatmul.mubr.f32.gmra.mxu0 %v182
  %v250 = vpop.f32.mrf.mxu0
  %v251 = vadd.f32 %v179, %v250
  %v252 = vpop.f32.mrf.mxu0
  %253 = vdwg.mxu0
  %v254 = vmax.f32 %v251, 0.0
  %255 = vset.pattern.permute.xlu0 3
  %256 = vperm.xlu0 %255, %v18
  %v257 = vpop.permute.xlu0 %256
  %v260 = vsel %vm24, %v16, 0
  %262 = vmatprep.subr.mxu0 0.0
  %263 = vmatpush1.msra.mxu0 0.0
  %264 = vmatprep.subr.mxu0 0.0
  %265 = vmatpush1.msra.mxu0 0.0
  %266 = vmatprep.subr.mxu0 0.0
  %267 = vmatpush1.msra.mxu0 0.0
  %268 = vmatprep.subr.mxu0 0.0
  %269 = vmatpush1.msra.mxu0 0.0
  %270 = vmatprep.subr.mxu0 0.0
  %271 = vmatpush1.msra.mxu0 0.0
  %272 = vmatprep.subr.mxu0 0.0
  %273 = vmatpush1.msra.mxu0 0.0
  %274 = vmatprep.subr.mxu0 0.0
  %275 = vmatpush1.msra.mxu0 0.0
  %276 = vmatprep.subr.mxu0 0.0
  %277 = vmatpush1.msra.mxu0 0.0
  %278 = vmatprep.subr.mxu0 0.0
  %279 = vmatpush1.msra.mxu0 0.0
  %280 = vmatprep.subr.mxu0 0.0
  %281 = vmatpush1.msra.mxu0 0.0
  %282 = vmatprep.subr.mxu0 0.0
  %283 = vmatpush1.msra.mxu0 0.0
  %284 = vmatprep.subr.mxu0 0.0
  %285 = vmatpush1.msra.mxu0 0.0
  %286 = vmatprep.subr.mxu0 0.0
  %287 = vmatpush1.msra.mxu0 0.0
  %288 = vmatprep.subr.mxu0 0.0
  %289 = vmatpush1.msra.mxu0 0.0
  %290 = vmatprep.subr.mxu0 0.0
  %291 = vmatpush1.msra.mxu0 0.0
  %292 = vmatprep.subr.mxu0 0.0
  %293 = vmatpush1.msra.mxu0 %v254
  %294 = vmatprep.subr.mxu0 0.0
  %295 = vmatpush2.msra.mxu0 0.0
  %296 = vmatprep.subr.mxu0 0.0
  %297 = vmatpush2.msra.mxu0 0.0
  %298 = vmatprep.subr.mxu0 0.0
  %299 = vmatpush2.msra.mxu0 0.0
  %300 = vmatprep.subr.mxu0 0.0
  %301 = vmatpush2.msra.mxu0 0.0
  %302 = vmatprep.subr.mxu0 0.0
  %303 = vmatpush2.msra.mxu0 0.0
  %304 = vmatprep.subr.mxu0 0.0
  %305 = vmatpush2.msra.mxu0 0.0
  %306 = vmatprep.subr.mxu0 0.0
  %307 = vmatpush2.msra.mxu0 0.0
  %308 = vmatprep.subr.mxu0 0.0
  %309 = vmatpush2.msra.mxu0 0.0
  %310 = vmatprep.subr.mxu0 0.0
  %311 = vmatpush2.msra.mxu0 0.0
  %312 = vmatprep.subr.mxu0 0.0
  %313 = vmatpush2.msra.mxu0 0.0
  %314 = vmatprep.subr.mxu0 0.0
  %315 = vmatpush2.msra.mxu0 0.0
  %316 = vmatprep.subr.mxu0 0.0
  %317 = vmatpush2.msra.mxu0 0.0
  %318 = vmatprep.subr.mxu0 0.0
  %319 = vmatpush2.msra.mxu0 0.0
  %320 = vmatprep.subr.mxu0 0.0
  %321 = vmatpush2.msra.mxu0 0.0
  %322 = vmatprep.subr.mxu0 0.0
  %323 = vmatpush2.msra.mxu0 0.0
  %324 = vmatprep.subr.mxu0 0.0
  %325 = vmatpush2.msra.mxu0 0.0
  %326 = vmatprep.mubr.f32.mxu0 0.0
  %327 = vmatmul.mubr.f32.gmra.mxu0 %v260
  %v328 = vpop.f32.mrf.mxu0
  %v329 = vadd.f32 %v257, %v328
  %v330 = vpop.f32.mrf.mxu0
  %331 = vdwg.mxu0
  %v332 = vrot.slane %v329, 4
  %v333 = vmax.f32 %v329, %v332
  %v334 = vrot.slane %v333, 2
  %v335 = vmax.f32 %v333, %v334
  %v336 = vrot.slane %v335, 1
  %v337 = vmax.f32 %v335, %v336
  %v338 = vsub.f32 %v329, %v337
  %v339 = vmul.f32 %v338, 1.442695
  %v340 = vpow.pop %v339
  %v341 = vrot.slane %v340, 4
  %v342 = vadd.f32 %v340, %v341
  %v343 = vrot.slane %v342, 2
  %v344 = vadd.f32 %v342, %v343
  %v345 = vrot.slane %v344, 1
  %v346 = vadd.f32 %v344, %v345
  %v347 = vrcp.pop %v346
  %v348 = vmul.f32 %v346, %v347
  %v349 = vsub.f32 2.0, %v348
  %v350 = vmul.f32 %v347, %v349
  %v351 = vmul.f32 %v340, %v350
  %v353 = vsel %vm24, %v13, 0
  %355 = vmatprep.subr.mxu0 0.0
  %356 = vmatpush1.msra.mxu0 0.0
  %357 = vmatprep.subr.mxu0 0.0
  %358 = vmatpush1.msra.mxu0 0.0
  %359 = vmatprep.subr.mxu0 0.0
  %360 = vmatpush1.msra.mxu0 0.0
  %361 = vmatprep.subr.mxu0 0.0
  %362 = vmatpush1.msra.mxu0 0.0
  %363 = vmatprep.subr.mxu0 0.0
  %364 = vmatpush1.msra.mxu0 0.0
  %365 = vmatprep.subr.mxu0 0.0
  %366 = vmatpush1.msra.mxu0 0.0
  %367 = vmatprep.subr.mxu0 0.0
  %368 = vmatpush1.msra.mxu0 0.0
  %369 = vmatprep.subr.mxu0 0.0
  %370 = vmatpush1.msra.mxu0 0.0
  %371 = vmatprep.subr.mxu0 0.0
  %372 = vmatpush1.msra.mxu0 0.0
  %373 = vmatprep.subr.mxu0 0.0
  %374 = vmatpush1.msra.mxu0 0.0
  %375 = vmatprep.subr.mxu0 0.0
  %376 = vmatpush1.msra.mxu0 0.0
  %377 = vmatprep.subr.mxu0 0.0
  %378 = vmatpush1.msra.mxu0 0.0
  %379 = vmatprep.subr.mxu0 0.0
  %380 = vmatpush1.msra.mxu0 0.0
  %381 = vmatprep.subr.mxu0 0.0
  %382 = vmatpush1.msra.mxu0 0.0
  %383 = vmatprep.subr.mxu0 0.0
  %384 = vmatpush1.msra.mxu0 0.0
  %385 = vmatprep.subr.mxu0 0.0
  %386 = vmatpush1.msra.mxu0 %v11
  %387 = vmatprep.subr.mxu0 0.0
  %388 = vmatpush2.msra.mxu0 0.0
  %389 = vmatprep.subr.mxu0 0.0
  %390 = vmatpush2.msra.mxu0 0.0
  %391 = vmatprep.subr.mxu0 0.0
  %392 = vmatpush2.msra.mxu0 0.0
  %393 = vmatprep.subr.mxu0 0.0
  %394 = vmatpush2.msra.mxu0 0.0
  %395 = vmatprep.subr.mxu0 0.0
  %396 = vmatpush2.msra.mxu0 0.0
  %397 = vmatprep.subr.mxu0 0.0
  %398 = vmatpush2.msra.mxu0 0.0
  %399 = vmatprep.subr.mxu0 0.0
  %400 = vmatpush2.msra.mxu0 0.0
  %401 = vmatprep.subr.mxu0 0.0
  %402 = vmatpush2.msra.mxu0 0.0
  %403 = vmatprep.subr.mxu0 0.0
  %404 = vmatpush2.msra.mxu0 0.0
  %405 = vmatprep.subr.mxu0 0.0
  %406 = vmatpush2.msra.mxu0 0.0
  %407 = vmatprep.subr.mxu0 0.0
  %408 = vmatpush2.msra.mxu0 0.0
  %409 = vmatprep.subr.mxu0 0.0
  %410 = vmatpush2.msra.mxu0 0.0
  %411 = vmatprep.subr.mxu0 0.0
  %412 = vmatpush2.msra.mxu0 0.0
  %413 = vmatprep.subr.mxu0 0.0
  %414 = vmatpush2.msra.mxu0 0.0
  %415 = vmatprep.subr.mxu0 0.0
  %416 = vmatpush2.msra.mxu0 0.0
  %417 = vmatprep.subr.mxu0 0.0
  %418 = vmatpush2.msra.mxu0 0.0
  %419 = vmatprep.mubr.f32.mxu0 0.0
  %420 = vmatmul.mubr.f32.gmra.mxu0 %v353
  %v421 = vpop.f32.mrf.mxu0
  %v422 = vadd.f32 %v22, %v421
  %v423 = vpop.f32.mrf.mxu0
  %424 = vdwg.mxu0
  %v425 = vmax.f32 %v422, 0.0
  %426 = vmatprep.subr.mxu0 0.0
  %427 = vmatpush1.msra.mxu0 0.0
  %428 = vmatprep.subr.mxu0 0.0
  %429 = vmatpush1.msra.mxu0 0.0
  %430 = vmatprep.subr.mxu0 0.0
  %431 = vmatpush1.msra.mxu0 0.0
  %432 = vmatprep.subr.mxu0 0.0
  %433 = vmatpush1.msra.mxu0 0.0
  %434 = vmatprep.subr.mxu0 0.0
  %435 = vmatpush1.msra.mxu0 0.0
  %436 = vmatprep.subr.mxu0 0.0
  %437 = vmatpush1.msra.mxu0 0.0
  %438 = vmatprep.subr.mxu0 0.0
  %439 = vmatpush1.msra.mxu0 0.0
  %440 = vmatprep.subr.mxu0 0.0
  %441 = vmatpush1.msra.mxu0 0.0
  %442 = vmatprep.subr.mxu0 0.0
  %443 = vmatpush1.msra.mxu0 0.0
  %444 = vmatprep.subr.mxu0 0.0
  %445 = vmatpush1.msra.mxu0 0.0
  %446 = vmatprep.subr.mxu0 0.0
  %447 = vmatpush1.msra.mxu0 0.0
  %448 = vmatprep.subr.mxu0 0.0
  %449 = vmatpush1.msra.mxu0 0.0
  %450 = vmatprep.subr.mxu0 0.0
  %451 = vmatpush1.msra.mxu0 0.0
  %452 = vmatprep.subr.mxu0 0.0
  %453 = vmatpush1.msra.mxu0 0.0
  %454 = vmatprep.subr.mxu0 0.0
  %455 = vmatpush1.msra.mxu0 0.0
  %456 = vmatprep.subr.mxu0 0.0
  %457 = vmatpush1.msra.mxu0 %v425
  %458 = vmatprep.subr.mxu0 0.0
  %459 = vmatpush2.msra.mxu0 0.0
  %460 = vmatprep.subr.mxu0 0.0
  %461 = vmatpush2.msra.mxu0 0.0
  %462 = vmatprep.subr.mxu0 0.0
  %463 = vmatpush2.msra.mxu0 0.0
  %464 = vmatprep.subr.mxu0 0.0
  %465 = vmatpush2.msra.mxu0 0.0
  %466 = vmatprep.subr.mxu0 0.0
  %467 = vmatpush2.msra.mxu0 0.0
  %468 = vmatprep.subr.mxu0 0.0
  %469 = vmatpush2.msra.mxu0 0.0
  %470 = vmatprep.subr.mxu0 0.0
  %471 = vmatpush2.msra.mxu0 0.0
  %472 = vmatprep.subr.mxu0 0.0
  %473 = vmatpush2.msra.mxu0 0.0
  %474 = vmatprep.subr.mxu0 0.0
  %475 = vmatpush2.msra.mxu0 0.0
  %476 = vmatprep.subr.mxu0 0.0
  %477 = vmatpush2.msra.mxu0 0.0
  %478 = vmatprep.subr.mxu0 0.0
  %479 = vmatpush2.msra.mxu0 0.0
  %480 = vmatprep.subr.mxu0 0.0
  %481 = vmatpush2.msra.mxu0 0.0
  %482 = vmatprep.subr.mxu0 0.0
  %483 = vmatpush2.msra.mxu0 0.0
  %484 = vmatprep.subr.mxu0 0.0
  %485 = vmatpush2.msra.mxu0 0.0
  %486 = vmatprep.subr.mxu0 0.0
  %487 = vmatpush2.msra.mxu0 0.0
  %488 = vmatprep.subr.mxu0 0.0
  %489 = vmatpush2.msra.mxu0 0.0
  %490 = vmatprep.mubr.f32.mxu0 0.0
  %491 = vmatmul.mubr.f32.gmra.mxu0 %v104
  %v492 = vpop.f32.mrf.mxu0
  %v493 = vadd.f32 %v101, %v492
  %v494 = vpop.f32.mrf.mxu0
  %495 = vdwg.mxu0
  %v496 = vmax.f32 %v493, 0.0
  %497 = vmatprep.subr.mxu0 0.0
  %498 = vmatpush1.msra.mxu0 0.0
  %499 = vmatprep.subr.mxu0 0.0
  %500 = vmatpush1.msra.mxu0 0.0
  %501 = vmatprep.subr.mxu0 0.0
  %502 = vmatpush1.msra.mxu0 0.0
  %503 = vmatprep.subr.mxu0 0.0
  %504 = vmatpush1.msra.mxu0 0.0
  %505 = vmatprep.subr.mxu0 0.0
  %506 = vmatpush1.msra.mxu0 0.0
  %507 = vmatprep.subr.mxu0 0.0
  %508 = vmatpush1.msra.mxu0 0.0
  %509 = vmatprep.subr.mxu0 0.0
  %510 = vmatpush1.msra.mxu0 0.0
  %511 = vmatprep.subr.mxu0 0.0
  %512 = vmatpush1.msra.mxu0 0.0
  %513 = vmatprep.subr.mxu0 0.0
  %514 = vmatpush1.msra.mxu0 0.0
  %515 = vmatprep.subr.mxu0 0.0
  %516 = vmatpush1.msra.mxu0 0.0
  %517 = vmatprep.subr.mxu0 0.0
  %518 = vmatpush1.msra.mxu0 0.0
  %519 = vmatprep.subr.mxu0 0.0
  %520 = vmatpush1.msra.mxu0 0.0
  %521 = vmatprep.subr.mxu0 0.0
  %522 = vmatpush1.msra.mxu0 0.0
  %523 = vmatprep.subr.mxu0 0.0
  %524 = vmatpush1.msra.mxu0 0.0
  %525 = vmatprep.subr.mxu0 0.0
  %526 = vmatpush1.msra.mxu0 0.0
  %527 = vmatprep.subr.mxu0 0.0
  %528 = vmatpush1.msra.mxu0 %v496
  %529 = vmatprep.subr.mxu0 0.0
  %530 = vmatpush2.msra.mxu0 0.0
  %531 = vmatprep.subr.mxu0 0.0
  %532 = vmatpush2.msra.mxu0 0.0
  %533 = vmatprep.subr.mxu0 0.0
  %534 = vmatpush2.msra.mxu0 0.0
  %535 = vmatprep.subr.mxu0 0.0
  %536 = vmatpush2.msra.mxu0 0.0
  %537 = vmatprep.subr.mxu0 0.0
  %538 = vmatpush2.msra.mxu0 0.0
  %539 = vmatprep.subr.mxu0 0.0
  %540 = vmatpush2.msra.mxu0 0.0
  %541 = vmatprep.subr.mxu0 0.0
  %542 = vmatpush2.msra.mxu0 0.0
  %543 = vmatprep.subr.mxu0 0.0
  %544 = vmatpush2.msra.mxu0 0.0
  %545 = vmatprep.subr.mxu0 0.0
  %546 = vmatpush2.msra.mxu0 0.0
  %547 = vmatprep.subr.mxu0 0.0
  %548 = vmatpush2.msra.mxu0 0.0
  %549 = vmatprep.subr.mxu0 0.0
  %550 = vmatpush2.msra.mxu0 0.0
  %551 = vmatprep.subr.mxu0 0.0
  %552 = vmatpush2.msra.mxu0 0.0
  %553 = vmatprep.subr.mxu0 0.0
  %554 = vmatpush2.msra.mxu0 0.0
  %555 = vmatprep.subr.mxu0 0.0
  %556 = vmatpush2.msra.mxu0 0.0
  %557 = vmatprep.subr.mxu0 0.0
  %558 = vmatpush2.msra.mxu0 0.0
  %559 = vmatprep.subr.mxu0 0.0
  %560 = vmatpush2.msra.mxu0 0.0
  %561 = vmatprep.mubr.f32.mxu0 0.0
  %562 = vmatmul.mubr.f32.gmra.mxu0 %v182
  %v563 = vpop.f32.mrf.mxu0
  %v564 = vadd.f32 %v179, %v563
  %v565 = vpop.f32.mrf.mxu0
  %566 = vdwg.mxu0
  %v567 = vmax.f32 %v564, 0.0
  %568 = vset.pattern.permute.xlu0 4
  %569 = vperm.xlu0 %568, %v18
  %v570 = vpop.permute.xlu0 %569
  %v573 = vsel %vm24, %v17, 0
  %575 = vmatprep.subr.mxu0 0.0
  %576 = vmatpush1.msra.mxu0 0.0
  %577 = vmatprep.subr.mxu0 0.0
  %578 = vmatpush1.msra.mxu0 0.0
  %579 = vmatprep.subr.mxu0 0.0
  %580 = vmatpush1.msra.mxu0 0.0
  %581 = vmatprep.subr.mxu0 0.0
  %582 = vmatpush1.msra.mxu0 0.0
  %583 = vmatprep.subr.mxu0 0.0
  %584 = vmatpush1.msra.mxu0 0.0
  %585 = vmatprep.subr.mxu0 0.0
  %586 = vmatpush1.msra.mxu0 0.0
  %587 = vmatprep.subr.mxu0 0.0
  %588 = vmatpush1.msra.mxu0 0.0
  %589 = vmatprep.subr.mxu0 0.0
  %590 = vmatpush1.msra.mxu0 0.0
  %591 = vmatprep.subr.mxu0 0.0
  %592 = vmatpush1.msra.mxu0 0.0
  %593 = vmatprep.subr.mxu0 0.0
  %594 = vmatpush1.msra.mxu0 0.0
  %595 = vmatprep.subr.mxu0 0.0
  %596 = vmatpush1.msra.mxu0 0.0
  %597 = vmatprep.subr.mxu0 0.0
  %598 = vmatpush1.msra.mxu0 0.0
  %599 = vmatprep.subr.mxu0 0.0
  %600 = vmatpush1.msra.mxu0 0.0
  %601 = vmatprep.subr.mxu0 0.0
  %602 = vmatpush1.msra.mxu0 0.0
  %603 = vmatprep.subr.mxu0 0.0
  %604 = vmatpush1.msra.mxu0 0.0
  %605 = vmatprep.subr.mxu0 0.0
  %606 = vmatpush1.msra.mxu0 %v567
  %607 = vmatprep.subr.mxu0 0.0
  %608 = vmatpush2.msra.mxu0 0.0
  %609 = vmatprep.subr.mxu0 0.0
  %610 = vmatpush2.msra.mxu0 0.0
  %611 = vmatprep.subr.mxu0 0.0
  %612 = vmatpush2.msra.mxu0 0.0
  %613 = vmatprep.subr.mxu0 0.0
  %614 = vmatpush2.msra.mxu0 0.0
  %615 = vmatprep.subr.mxu0 0.0
  %616 = vmatpush2.msra.mxu0 0.0
  %617 = vmatprep.subr.mxu0 0.0
  %618 = vmatpush2.msra.mxu0 0.0
  %619 = vmatprep.subr.mxu0 0.0
  %620 = vmatpush2.msra.mxu0 0.0
  %621 = vmatprep.subr.mxu0 0.0
  %622 = vmatpush2.msra.mxu0 0.0
  %623 = vmatprep.subr.mxu0 0.0
  %624 = vmatpush2.msra.mxu0 0.0
  %625 = vmatprep.subr.mxu0 0.0
  %626 = vmatpush2.msra.mxu0 0.0
  %627 = vmatprep.subr.mxu0 0.0
  %628 = vmatpush2.msra.mxu0 0.0
  %629 = vmatprep.subr.mxu0 0.0
  %630 = vmatpush2.msra.mxu0 0.0
  %631 = vmatprep.subr.mxu0 0.0
  %632 = vmatpush2.msra.mxu0 0.0
  %633 = vmatprep.subr.mxu0 0.0
  %634 = vmatpush2.msra.mxu0 0.0
  %635 = vmatprep.subr.mxu0 0.0
  %636 = vmatpush2.msra.mxu0 0.0
  %637 = vmatprep.subr.mxu0 0.0
  %638 = vmatpush2.msra.mxu0 0.0
  %639 = vmatprep.mubr.f32.mxu0 0.0
  %640 = vmatmul.mubr.f32.gmra.mxu0 %v573
  %v641 = vpop.f32.mrf.mxu0
  %v642 = vadd.f32 %v570, %v641
  %v643 = vpop.f32.mrf.mxu0
  %644 = vdwg.mxu0
  %v645 = vrot.slane %v642, 4
  %v646 = vmax.f32 %v642, %v645
  %v647 = vrot.slane %v646, 2
  %v648 = vmax.f32 %v646, %v647
  %v649 = vrot.slane %v648, 1
  %v650 = vmax.f32 %v648, %v649
  %v651 = vsub.f32 %v642, %v650
  %v652 = vmul.f32 %v651, 1.442695
  %v653 = vpow.pop %v652
  %v654 = vrot.slane %v653, 4
  %v655 = vadd.f32 %v653, %v654
  %v656 = vrot.slane %v655, 2
  %v657 = vadd.f32 %v655, %v656
  %v658 = vrot.slane %v657, 1
  %v659 = vadd.f32 %v657, %v658
  %v660 = vrcp.pop %v659
  %v661 = vmul.f32 %v659, %v660
  %v662 = vsub.f32 2.0, %v661
  %v663 = vmul.f32 %v660, %v662
  %v664 = vmul.f32 %v653, %v663
  %v665 = vadd.f32 %v351, %v664
  %666 = vst [vmem:[%s2] sm:$0xff] %v665
  // Predicated region
  $region10: #{mlp_forward.1} parent=0 // pred_check
    _
  $region11: #{mlp_forward.1} parent=0 // pred_check_branch
    %668 = sbr.rel (0) target = $region13
  $region12: #{mlp_forward.1} parent=0 // pred_region
    _
  $region13: #{mlp_forward.1} parent=0 // pred_fallthru
    _
  // Predicated region
  $region14: #{mlp_forward.1} parent=0 // pred_check
    _
  $region15: #{mlp_forward.1} parent=0 // pred_check_branch
    %670 = sbr.rel (0) target = $region17
  $region16: #{mlp_forward.1} parent=0 // pred_region
    _
  $region17: #{mlp_forward.1} parent=0 // pred_fallthru
    _

</llo_original>
